<compile_context>
chip_gen: v7x
topology: tpu7x:2x2x1
jax: 0.10.0
libtpu: 0.0.40
codegen_flags: <defaults>
</compile_context>

<pallas_src>
import jax
import jax.numpy as jnp
from jax.experimental import pallas as pl
from jax.experimental.pallas import tpu as pltpu


def _round_up(x, m):
    return ((x + m - 1) // m) * m


def _cdiv(a, b):
    return -(-a // b)


# ---------------------------------------------------------------------------
# Pallas kernel: one (Nb, Cout, TS) output tile = W @ x_tile + b
# ---------------------------------------------------------------------------
def _conv1x1_kernel(x_ref, w_ref, b_ref, o_ref):
    # x_ref: (Nb, Cin, TS)  -- Nb batch rows, full channels, spatial tile
    # w_ref: (Cout, Cin)    -- full 1x1 conv weight (resident in VMEM)
    # b_ref: (Cout, 1)      -- bias, broadcasts over the lane (spatial) axis
    # o_ref: (Nb, Cout, TS) -- lane-dense output tile (TS multiple of 128)
    nb, cin, _ = x_ref.shape
    w = w_ref[...].astype(jnp.float32)          # (Cout, Cin)
    b = b_ref[...].astype(jnp.float32)          # (Cout, 1)
    use_mxu = cin > 8
    for n in range(nb):                          # Nb is a compile-time constant
        x_n = x_ref[n].astype(jnp.float32)       # (Cin, TS)
        if use_mxu:
            acc = jnp.dot(w, x_n, preferred_element_type=jnp.float32)
        else:
            # Tiny channel count: unrolled VPU broadcast-FMA, skip the MXU.
            acc = w[:, 0:1] * x_n[0:1, :]
            for c in range(1, cin):
                acc = acc + w[:, c:c + 1] * x_n[c:c + 1, :]
        o_ref[n] = (acc + b).astype(o_ref.dtype)


# ---------------------------------------------------------------------------
# Tiling plan: VMEM-budget-driven, pad-to-128 spatial tiling
# ---------------------------------------------------------------------------
def _plan_tiling(n, cin, cout, hw, itemsize,
                 vmem_budget_bytes=12 << 20, lane_cap=32768):
    """Returns (fold_n, tile_lanes, n_tiles, hw_padded)."""
    cin_p = _round_up(cin, 8)     # sublane padding of the x block
    cout_p = _round_up(cout, 8)   # sublane padding of the out block
    hw128 = _round_up(max(hw, 1), 128)

    def max_lanes(nb):
        # x + out blocks, each double-buffered by the pipeline.
        return vmem_budget_bytes // (2 * nb * (cin_p + cout_p) * itemsize)

    fold_n = max_lanes(n) >= 128          # fold batch into the block if it fits
    nb = n if fold_n else 1

    ts = max(128, min(lane_cap, max_lanes(nb), hw128))
    ts -= ts % 128

    n_tiles = _cdiv(hw128, ts)
    # v7x megacore: keep >= 2 parallel grid steps when the spatial axis allows
    # it and the batch axis does not already provide parallelism.
    if n_tiles == 1 and hw128 >= 256 and (fold_n or n == 1):
        n_tiles = 2
    # Rebalance the tile so spatial padding stays < n_tiles*128 lanes.
    ts = _round_up(_cdiv(hw128, n_tiles), 128)
    n_tiles = _cdiv(hw128, ts)
    hw_padded = n_tiles * ts
    return fold_n, ts, n_tiles, hw_padded


# ---------------------------------------------------------------------------
# Wrapper
# ---------------------------------------------------------------------------
def pred_only_forward(x_nchw, w_conv, b_conv):
    """x_nchw: (N, Cin, H, W); w_conv: (Cout, Cin, 1, 1); b_conv: (Cout,).
    Returns (N, Cout, H, W) in x's dtype, matching nn.Conv2d(k=1, s=1, p=0)."""
    N, Cin, H, W = x_nchw.shape
    Cout = w_conv.shape[0]
    HW = H * W
    out_dtype = x_nchw.dtype
    itemsize = jnp.dtype(out_dtype).itemsize

    fold_n, ts, n_tiles, hw_padded = _plan_tiling(N, Cin, Cout, HW, itemsize)

    x_r = x_nchw.reshape(N, Cin, HW)               # free reshape (contiguous)
    pad = hw_padded - HW
    if pad:
        x_r = jnp.pad(x_r, ((0, 0), (0, 0), (0, pad)))
    w_mat = w_conv.reshape(Cout, Cin)
    b_col = b_conv.reshape(Cout, 1)

    if fold_n:
        grid = (n_tiles,)
        in_specs = [
            pl.BlockSpec((N, Cin, ts), lambda s: (0, 0, s)),     # x tile
            pl.BlockSpec((Cout, Cin), lambda s: (0, 0)),          # weight
            pl.BlockSpec((Cout, 1),   lambda s: (0, 0)),          # bias
        ]
        out_specs = pl.BlockSpec((N, Cout, ts), lambda s: (0, 0, s))
        dims = ("parallel",)
    else:
        grid = (N, n_tiles)
        in_specs = [
            pl.BlockSpec((1, Cin, ts), lambda n, s: (n, 0, s)),   # x tile
            pl.BlockSpec((Cout, Cin), lambda n, s: (0, 0)),        # weight
            pl.BlockSpec((Cout, 1),   lambda n, s: (0, 0)),        # bias
        ]
        out_specs = pl.BlockSpec((1, Cout, ts), lambda n, s: (n, 0, s))
        dims = ("parallel", "parallel")

    out = pl.pallas_call(
        _conv1x1_kernel,
        out_shape=jax.ShapeDtypeStruct((N, Cout, hw_padded), out_dtype),
        grid=grid,
        in_specs=in_specs,
        out_specs=out_specs,
        compiler_params=pltpu.CompilerParams(dimension_semantics=dims),
    )(x_r, w_mat, b_col)

    if pad:
        out = out[:, :, :HW]
    return out.reshape(N, Cout, H, W)


# ---------------------------------------------------------------------------
# Pure-JAX reference (for correctness check)
# ---------------------------------------------------------------------------
def pred_only_ref(x, w_conv, b_conv):
    w = w_conv.reshape(w_conv.shape[0], w_conv.shape[1])      # (Cout, Cin)
    y = jnp.einsum('nchw,oc->nohw', x, w)
    return y + b_conv[None, :, None, None]


if __name__ == "__main__":
    key = jax.random.PRNGKey(0)
    k0, k1, k2, k3, k4, k5 = jax.random.split(key, 6)

    # Primary shapes consistent with PredOnly: batch=2, ch_in=4, ch_out=2, 16x16.
    N, Cin, Cout, H, W = 2, 4, 2, 16, 16
    x = jax.random.normal(k0, (N, Cin, H, W), jnp.float32)
    w_conv = jax.random.normal(k1, (Cout, Cin, 1, 1), jnp.float32) * 0.1
    b_conv = jax.random.normal(k2, (Cout,), jnp.float32) * 0.1

    out = jax.block_until_ready(pred_only_forward(x, w_conv, b_conv))
    ref = pred_only_ref(x, w_conv, b_conv)
    assert out.shape == (N, Cout, H, W)
    assert jnp.allclose(out, ref, rtol=1e-4, atol=1e-4), "mismatch vs reference"

    # Secondary check: non-128-divisible spatial size exercises the padding path.
    N2, Cin2, Cout2, H2, W2 = 1, 3, 5, 10, 12
    x2 = jax.random.normal(k3, (N2, Cin2, H2, W2), jnp.float32)
    w2 = jax.random.normal(k4, (Cout2, Cin2, 1, 1), jnp.float32) * 0.1
    b2 = jax.random.normal(k5, (Cout2,), jnp.float32) * 0.1
    out2 = jax.block_until_ready(pred_only_forward(x2, w2, b2))
    ref2 = pred_only_ref(x2, w2, b2)
    assert out2.shape == (N2, Cout2, H2, W2)
    assert jnp.allclose(out2, ref2, rtol=1e-4, atol=1e-4), "mismatch (padded path)"

    print("KERNEL_OK")
</pallas_src>

<mosaic_0001>
module attributes {stable_mosaic.version = 11 : i64} {
  func.func @_conv1x1_kernel(%arg0: i32, %arg1: memref<2x4x128xf32, #tpu.memory_space<vmem>>, %arg2: memref<2x4xf32, #tpu.memory_space<vmem>>, %arg3: memref<2x1xf32, #tpu.memory_space<vmem>>, %arg4: memref<2x2x128xf32, #tpu.memory_space<vmem>>) attributes {dimension_semantics = [#tpu.dimension_semantics<parallel>], iteration_bounds = array<i64: 2>, scalar_prefetch = 0 : i64, scratch_operands = 0 : i64, tpu.core_type = #tpu.core_type<tc>, window_params = [{transform_indices = @transform_0, window_bounds = array<i64: 2, 4, 128>}, {pipeline_mode = #tpu.pipeline_mode<synchronous>, transform_indices = @transform_1, window_bounds = array<i64: 2, 4>}, {pipeline_mode = #tpu.pipeline_mode<synchronous>, transform_indices = @transform_2, window_bounds = array<i64: 2, 1>}, {transform_indices = @transform_3, window_bounds = array<i64: 2, 2, 128>}]} {
    %c0 = arith.constant 0 : index
    %c0_0 = arith.constant 0 : index
    %0 = vector.load %arg2[%c0, %c0_0] : memref<2x4xf32, #tpu.memory_space<vmem>>, vector<2x4xf32>
    %c0_1 = arith.constant 0 : index
    %c0_2 = arith.constant 0 : index
    %1 = vector.load %arg3[%c0_1, %c0_2] : memref<2x1xf32, #tpu.memory_space<vmem>>, vector<2x1xf32>
    %c0_3 = arith.constant 0 : index
    %c0_4 = arith.constant 0 : index
    %c0_5 = arith.constant 0 : index
    %2 = vector.load %arg1[%c0_3, %c0_4, %c0_5] : memref<2x4x128xf32, #tpu.memory_space<vmem>>, vector<1x4x128xf32>
    %3 = vector.shape_cast %2 : vector<1x4x128xf32> to vector<4x128xf32>
    %4 = vector.extract_strided_slice %0 {offsets = [0, 0], sizes = [2, 1], strides = [1, 1]} : vector<2x4xf32> to vector<2x1xf32>
    %5 = vector.extract_strided_slice %3 {offsets = [0, 0], sizes = [1, 128], strides = [1, 1]} : vector<4x128xf32> to vector<1x128xf32>
    %6 = vector.broadcast %4 : vector<2x1xf32> to vector<2x128xf32>
    %7 = vector.broadcast %5 : vector<1x128xf32> to vector<2x128xf32>
    %8 = arith.mulf %6, %7 : vector<2x128xf32>
    %9 = vector.extract_strided_slice %0 {offsets = [0, 1], sizes = [2, 1], strides = [1, 1]} : vector<2x4xf32> to vector<2x1xf32>
    %10 = vector.extract_strided_slice %3 {offsets = [1, 0], sizes = [1, 128], strides = [1, 1]} : vector<4x128xf32> to vector<1x128xf32>
    %11 = vector.broadcast %9 : vector<2x1xf32> to vector<2x128xf32>
    %12 = vector.broadcast %10 : vector<1x128xf32> to vector<2x128xf32>
    %13 = arith.mulf %11, %12 : vector<2x128xf32>
    %14 = arith.addf %8, %13 : vector<2x128xf32>
    %15 = vector.extract_strided_slice %0 {offsets = [0, 2], sizes = [2, 1], strides = [1, 1]} : vector<2x4xf32> to vector<2x1xf32>
    %16 = vector.extract_strided_slice %3 {offsets = [2, 0], sizes = [1, 128], strides = [1, 1]} : vector<4x128xf32> to vector<1x128xf32>
    %17 = vector.broadcast %15 : vector<2x1xf32> to vector<2x128xf32>
    %18 = vector.broadcast %16 : vector<1x128xf32> to vector<2x128xf32>
    %19 = arith.mulf %17, %18 : vector<2x128xf32>
    %20 = arith.addf %14, %19 : vector<2x128xf32>
    %21 = vector.extract_strided_slice %0 {offsets = [0, 3], sizes = [2, 1], strides = [1, 1]} : vector<2x4xf32> to vector<2x1xf32>
    %22 = vector.extract_strided_slice %3 {offsets = [3, 0], sizes = [1, 128], strides = [1, 1]} : vector<4x128xf32> to vector<1x128xf32>
    %23 = vector.broadcast %21 : vector<2x1xf32> to vector<2x128xf32>
    %24 = vector.broadcast %22 : vector<1x128xf32> to vector<2x128xf32>
    %25 = arith.mulf %23, %24 : vector<2x128xf32>
    %26 = arith.addf %20, %25 : vector<2x128xf32>
    %27 = vector.broadcast %1 : vector<2x1xf32> to vector<2x128xf32>
    %28 = arith.addf %26, %27 : vector<2x128xf32>
    %c0_6 = arith.constant 0 : index
    %c0_7 = arith.constant 0 : index
    %c0_8 = arith.constant 0 : index
    %29 = vector.load %arg4[%c0_6, %c0_7, %c0_8] : memref<2x2x128xf32, #tpu.memory_space<vmem>>, vector<1x2x128xf32>
    %30 = vector.shape_cast %29 : vector<1x2x128xf32> to vector<2x128xf32>
    %31 = vector.shape_cast %28 : vector<2x128xf32> to vector<1x2x128xf32>
    tpu.vector_store %arg4[%c0_6, %c0_7, %c0_8], %31 {strides = array<i32>} : memref<2x2x128xf32, #tpu.memory_space<vmem>>, vector<1x2x128xf32>,
    %c1 = arith.constant 1 : index
    %c0_9 = arith.constant 0 : index
    %c0_10 = arith.constant 0 : index
    %32 = vector.load %arg1[%c1, %c0_9, %c0_10] : memref<2x4x128xf32, #tpu.memory_space<vmem>>, vector<1x4x128xf32>
    %33 = vector.shape_cast %32 : vector<1x4x128xf32> to vector<4x128xf32>
    %34 = vector.extract_strided_slice %0 {offsets = [0, 0], sizes = [2, 1], strides = [1, 1]} : vector<2x4xf32> to vector<2x1xf32>
    %35 = vector.extract_strided_slice %33 {offsets = [0, 0], sizes = [1, 128], strides = [1, 1]} : vector<4x128xf32> to vector<1x128xf32>
    %36 = vector.broadcast %34 : vector<2x1xf32> to vector<2x128xf32>
    %37 = vector.broadcast %35 : vector<1x128xf32> to vector<2x128xf32>
    %38 = arith.mulf %36, %37 : vector<2x128xf32>
    %39 = vector.extract_strided_slice %0 {offsets = [0, 1], sizes = [2, 1], strides = [1, 1]} : vector<2x4xf32> to vector<2x1xf32>
    %40 = vector.extract_strided_slice %33 {offsets = [1, 0], sizes = [1, 128], strides = [1, 1]} : vector<4x128xf32> to vector<1x128xf32>
    %41 = vector.broadcast %39 : vector<2x1xf32> to vector<2x128xf32>
    %42 = vector.broadcast %40 : vector<1x128xf32> to vector<2x128xf32>
    %43 = arith.mulf %41, %42 : vector<2x128xf32>
    %44 = arith.addf %38, %43 : vector<2x128xf32>
    %45 = vector.extract_strided_slice %0 {offsets = [0, 2], sizes = [2, 1], strides = [1, 1]} : vector<2x4xf32> to vector<2x1xf32>
    %46 = vector.extract_strided_slice %33 {offsets = [2, 0], sizes = [1, 128], strides = [1, 1]} : vector<4x128xf32> to vector<1x128xf32>
    %47 = vector.broadcast %45 : vector<2x1xf32> to vector<2x128xf32>
    %48 = vector.broadcast %46 : vector<1x128xf32> to vector<2x128xf32>
    %49 = arith.mulf %47, %48 : vector<2x128xf32>
    %50 = arith.addf %44, %49 : vector<2x128xf32>
    %51 = vector.extract_strided_slice %0 {offsets = [0, 3], sizes = [2, 1], strides = [1, 1]} : vector<2x4xf32> to vector<2x1xf32>
    %52 = vector.extract_strided_slice %33 {offsets = [3, 0], sizes = [1, 128], strides = [1, 1]} : vector<4x128xf32> to vector<1x128xf32>
    %53 = vector.broadcast %51 : vector<2x1xf32> to vector<2x128xf32>
    %54 = vector.broadcast %52 : vector<1x128xf32> to vector<2x128xf32>
    %55 = arith.mulf %53, %54 : vector<2x128xf32>
    %56 = arith.addf %50, %55 : vector<2x128xf32>
    %57 = vector.broadcast %1 : vector<2x1xf32> to vector<2x128xf32>
    %58 = arith.addf %56, %57 : vector<2x128xf32>
    %c1_11 = arith.constant 1 : index
    %c0_12 = arith.constant 0 : index
    %c0_13 = arith.constant 0 : index
    %59 = vector.load %arg4[%c1_11, %c0_12, %c0_13] : memref<2x2x128xf32, #tpu.memory_space<vmem>>, vector<1x2x128xf32>
    %60 = vector.shape_cast %59 : vector<1x2x128xf32> to vector<2x128xf32>
    %61 = vector.shape_cast %58 : vector<2x128xf32> to vector<1x2x128xf32>
    tpu.vector_store %arg4[%c1_11, %c0_12, %c0_13], %61 {strides = array<i32>} : memref<2x2x128xf32, #tpu.memory_space<vmem>>, vector<1x2x128xf32>,
    return
  }
  func.func @transform_0(%arg0: i32) -> (i32, i32, i32) {
    %c0_i32 = arith.constant 0 : i32
    %c0_i32_0 = arith.constant 0 : i32
    %c0_i32_1 = arith.constant 0 : i32
    return %c0_i32, %c0_i32_0, %arg0 : i32, i32, i32
  }
  func.func @transform_1(%arg0: i32) -> (i32, i32) {
    %c0_i32 = arith.constant 0 : i32
    %c0_i32_0 = arith.constant 0 : i32
    %c0_i32_1 = arith.constant 0 : i32
    return %c0_i32, %c0_i32_0 : i32, i32
  }
  func.func @transform_2(%arg0: i32) -> (i32, i32) {
    %c0_i32 = arith.constant 0 : i32
    %c0_i32_0 = arith.constant 0 : i32
    %c0_i32_1 = arith.constant 0 : i32
    return %c0_i32, %c0_i32_0 : i32, i32
  }
  func.func @transform_3(%arg0: i32) -> (i32, i32, i32) {
    %c0_i32 = arith.constant 0 : i32
    %c0_i32_0 = arith.constant 0 : i32
    %c0_i32_1 = arith.constant 0 : i32
    return %c0_i32, %c0_i32_0, %arg0 : i32, i32, i32
  }
}

</mosaic_0001>

<llo_original>
// kernel: tpu_custom_call.1
$region0: #{tpu_custom_call.1}
  #allocation0 [shape = 'u32[]', space=smem, size = 0x4, offset = 0x4, fixed_abs, tag = 'smem constant byte address 0x4 - core index']
  #allocation1 [shape = 'u32[144,128]{1,0:T(1,128)}', space=vmem, size = 0x12000, scoped, tag = 'internal scratch']
  %s0 = inlined_call_operand.hbm [shape: f32[2,4,256], index: 0, kind: input, shape index: {}]
  %s1 = inlined_call_operand.vmem [shape: f32[2,4], index: 1, kind: input, shape index: {}]
  %s2 = inlined_call_operand.vmem [shape: f32[2,1], index: 2, kind: input, shape index: {}]
  %s3 = inlined_call_operand.hbm [shape: f32[2,2,256], index: 3, kind: output, shape index: {}]
  %s4 = sld [smem:[#allocation0]]
  $region49: #{tpu_custom_call.1} parent=0
    _
  %s6 = ssub.s32 1, %s4
  %s7 = scalar_select 0, %s6, %s4
  $region1: #{tpu_custom_call.1} parent=0
    #allocation2 [shape = 'u8[8192]{0}', space=vmem, size = 0x2000, scoped, tag = 'input window, operand 0']
    #allocation3 [shape = 's32[2]{0}', space=sflag, size = 0x8, scoped, tag = 'scoped memory for tpu_custom_call.1']
    #allocation4 [shape = 's32[2]{0}', space=sflag, size = 0x8, scoped, tag = 'scoped memory for tpu_custom_call.1']
    #allocation5 [shape = 'u8[4096]{0}', space=vmem, size = 0x1000, scoped, tag = 'output window, operand 0']
    %8 = vsyncpa [#allocation3], 0
    %s9 = scalar_lea.sflag [#allocation3], 1
    %10 = vsyncpa %s9, 0
    %11 = vsyncpa [#allocation4], 0
    %s12 = scalar_lea.sflag [#allocation4], 1
    %13 = vsyncpa %s12, 0
    loop: start=0, step=1, limit=4
    $region2: #{tpu_custom_call.1} parent=1 // loop_pre_header
      _
    $region3: #{tpu_custom_call.1} parent=1 // loop_header
      %s15 = sphi 0, %s19
      %p16 = scmp.ge.s32.totalorder %s15, 4
      %s25 = sphi 0, %s27
      %s28 = sphi 0, %s25
      %s29 = sphi 0, %s28
      %s45 = sphi 0, %s29
      %s49 = sphi 0, %s49
      %s51 = sphi 0, %s49
      %s52 = sphi 0, %s51
      %s66 = sphi 0, %s52
      %s70 = sphi 0, %s70
      %s72 = sphi 0, %s70
      %s73 = sphi 0, %s72
      %s87 = sphi 0, %s73
      %s93 = sphi 0, %s95
      %s96 = sphi 0, %s93
      %s97 = sphi 0, %s96
      %s113 = sphi 0, %s97
    $region4: #{tpu_custom_call.1} parent=1 // loop_header_branch
      %18 = sbr.rel (%p16) target = $region8
    $region5: #{tpu_custom_call.1} parent=1 // loop_body
      %s20 = ssub.s32 %s15, 1
      %s21 = ssub.s32 %s15, 2
      %s22 = sadd.s32 %s15, 1
      %s23 = ssub.s32 %s15, %s22
      %p24 = scmp.eq.s32.totalorder %s23, 0
      %s26 = sadd.s32 %s25, 1
      %s27 = scalar_select %p24, %s25, %s26
      %p30 = pneg %p24
      %p31 = scmp.eq.s32.totalorder %s15, 1
      %p32 = por %p30, %p31
      %p33 = scmp.ne.s32.totalorder %s25, %s28
      %p34 = scmp.eq.s32.totalorder %s15, 0
      %p35 = por %p33, %p34
      %p36 = scmp.ne.s32.totalorder %s25, %s28
      %p37 = scmp.eq.s32.totalorder %s20, 1
      %p38 = por %p36, %p37
      %p39 = scmp.ne.s32.totalorder %s28, %s29
      %p40 = scmp.eq.s32.totalorder %s20, 0
      %p41 = por %p39, %p40
      %p42 = scmp.ne.s32.totalorder %s28, %s29
      %p43 = scmp.eq.s32.totalorder %s21, 1
      %p44 = por %p42, %p43
      %p46 = scmp.ne.s32.totalorder %s29, %s45
      %p47 = scmp.eq.s32.totalorder %s21, 0
      %p48 = por %p46, %p47
      %s50 = sadd.s32 %s49, 1
      %p53 = scmp.eq.s32.totalorder %s15, 1
      %p54 = scmp.ne.s32.totalorder %s49, %s51
      %p55 = scmp.eq.s32.totalorder %s15, 0
      %p56 = por %p54, %p55
      %p57 = scmp.ne.s32.totalorder %s49, %s51
      %p58 = scmp.eq.s32.totalorder %s20, 1
      %p59 = por %p57, %p58
      %p60 = scmp.ne.s32.totalorder %s51, %s52
      %p61 = scmp.eq.s32.totalorder %s20, 0
      %p62 = por %p60, %p61
      %p63 = scmp.ne.s32.totalorder %s51, %s52
      %p64 = scmp.eq.s32.totalorder %s21, 1
      %p65 = por %p63, %p64
      %p67 = scmp.ne.s32.totalorder %s52, %s66
      %p68 = scmp.eq.s32.totalorder %s21, 0
      %p69 = por %p67, %p68
      %s71 = sadd.s32 %s70, 1
      %p74 = scmp.eq.s32.totalorder %s15, 1
      %p75 = scmp.ne.s32.totalorder %s70, %s72
      %p76 = scmp.eq.s32.totalorder %s15, 0
      %p77 = por %p75, %p76
      %p78 = scmp.ne.s32.totalorder %s70, %s72
      %p79 = scmp.eq.s32.totalorder %s20, 1
      %p80 = por %p78, %p79
      %p81 = scmp.ne.s32.totalorder %s72, %s73
      %p82 = scmp.eq.s32.totalorder %s20, 0
      %p83 = por %p81, %p82
      %p84 = scmp.ne.s32.totalorder %s72, %s73
      %p85 = scmp.eq.s32.totalorder %s21, 1
      %p86 = por %p84, %p85
      %p88 = scmp.ne.s32.totalorder %s73, %s87
      %p89 = scmp.eq.s32.totalorder %s21, 0
      %p90 = por %p88, %p89
      %s91 = ssub.s32 %s15, %s22
      %p92 = scmp.eq.s32.totalorder %s91, 0
      %s94 = sadd.s32 %s93, 1
      %s95 = scalar_select %p92, %s93, %s94
      %p98 = pneg %p92
      %p99 = scmp.eq.s32.totalorder %s15, 1
      %p100 = por %p98, %p99
      %p101 = scmp.ne.s32.totalorder %s93, %s96
      %p102 = scmp.eq.s32.totalorder %s15, 0
      %p103 = por %p101, %p102
      %p104 = scmp.ne.s32.totalorder %s93, %s96
      %p105 = scmp.eq.s32.totalorder %s20, 1
      %p106 = por %p104, %p105
      %p107 = scmp.ne.s32.totalorder %s96, %s97
      %p108 = scmp.eq.s32.totalorder %s20, 0
      %p109 = por %p107, %p108
      %p110 = scmp.ne.s32.totalorder %s96, %s97
      %p111 = scmp.eq.s32.totalorder %s21, 1
      %p112 = por %p110, %p111
      %p114 = scmp.ne.s32.totalorder %s97, %s113
      %p115 = scmp.eq.s32.totalorder %s21, 0
      %p116 = por %p114, %p115
      %p117 = scmp.le.s32.totalorder 1, %s15
      %p118 = scmp.lt.s32.totalorder %s15, 3
      %p119 = pnand %p117, %p118
      %p120 = pneg %p119
      // Predicated region
      $region9: #{tpu_custom_call.1} parent=5 // pred_check
        _
      $region10: #{tpu_custom_call.1} parent=5 // pred_check_branch
        %122 = sbr.rel (%p119) target = $region12
      $region11: #{tpu_custom_call.1} parent=5 // pred_region
        %s123 = ssub.s32 %s15, 1
        // Predicated region
        $region13: #{tpu_custom_call.1} parent=11 // pred_check
          %p124 = pneg %p62
        $region14: #{tpu_custom_call.1} parent=11 // pred_check_branch
          %126 = sbr.rel (%p124) target = $region16
        $region15: #{tpu_custom_call.1} parent=11 // pred_region
          _
        $region16: #{tpu_custom_call.1} parent=11 // pred_fallthru
          _
        // Predicated region
        $region17: #{tpu_custom_call.1} parent=11 // pred_check
          %p127 = pneg %p83
        $region18: #{tpu_custom_call.1} parent=11 // pred_check_branch
          %129 = sbr.rel (%p127) target = $region20
        $region19: #{tpu_custom_call.1} parent=11 // pred_region
          _
        $region20: #{tpu_custom_call.1} parent=11 // pred_fallthru
          _
      $region12: #{tpu_custom_call.1} parent=5 // pred_fallthru
        _
      %p130 = scmp.lt.s32.totalorder %s15, 2
      // Predicated region
      $region21: #{tpu_custom_call.1} parent=5 // pred_check
        %p131 = pneg %p130
      $region22: #{tpu_custom_call.1} parent=5 // pred_check_branch
        %133 = sbr.rel (%p131) target = $region24
      $region23: #{tpu_custom_call.1} parent=5 // pred_region
        // Predicated region
        $region25: #{tpu_custom_call.1} parent=23 // pred_check
          %p134 = pneg %p35
        $region26: #{tpu_custom_call.1} parent=23 // pred_check_branch
          %136 = sbr.rel (%p134) target = $region28
        $region27: #{tpu_custom_call.1} parent=23 // pred_region
          %s137 = sand.u32 %s25, 1
          %s138 = scalar_lea.sflag [#allocation3], %s137
          %s139 = sand.u32 %s25, 1
          %s140 = smul.addr %s139, 8
          %s141 = scalar_lea.vmem [#allocation2], %s140
          %s143 = ssub.s32 128, 128
          %144 = vsyncadd %s138, %s143
          %s145 = smul.addr %s15, 64
          %s146 = scalar_lea.hbm %s0, %s145
          %s147 = sshll.u32 %s141, 4
          %s148 = int_to_ptr.vmem [resolvable:$true] %s147
          %153 = dma.hbm_to_vmem [thread:$0]  %s146, 128, %s148, %s138, 128, 64, 4
        $region28: #{tpu_custom_call.1} parent=23 // pred_fallthru
          _
      $region24: #{tpu_custom_call.1} parent=5 // pred_fallthru
        _
      %p154 = scmp.le.s32.totalorder 1, %s15
      %p155 = scmp.lt.s32.totalorder %s15, 3
      %p156 = pnand %p154, %p155
      %p157 = pneg %p156
      // Predicated region
      $region29: #{tpu_custom_call.1} parent=5 // pred_check
        _
      $region30: #{tpu_custom_call.1} parent=5 // pred_check_branch
        %159 = sbr.rel (%p156) target = $region32
      $region31: #{tpu_custom_call.1} parent=5 // pred_region
        %s160 = ssub.s32 %s15, 1
        %s161 = sand.u32 %s28, 1
        %s162 = scalar_lea.sflag [#allocation3], %s161
        %s163 = sand.u32 %s28, 1
        %s164 = smul.addr %s163, 8
        %s165 = scalar_lea.vmem [#allocation2], %s164
        // Predicated region
        $region33: #{tpu_custom_call.1} parent=31 // pred_check
          %p166 = pneg %p41
        $region34: #{tpu_custom_call.1} parent=31 // pred_check_branch
          %168 = sbr.rel (%p166) target = $region36
        $region35: #{tpu_custom_call.1} parent=31 // pred_region
          %169 = dma.done %s162, 128
        $region36: #{tpu_custom_call.1} parent=31 // pred_fallthru
          _
        %s170 = sand.u32 %s28, 1
        %s171 = scalar_lea.sflag [#allocation3], %s170
        %s172 = sand.u32 %s28, 1
        %s173 = smul.addr %s172, 8
        %s174 = scalar_lea.vmem [#allocation2], %s173
        %p175 = pneg %p41
        %p176 = pneg %p38
        %p177 = pneg %p62
        %p178 = pneg %p59
        %p179 = pneg %p83
        %p180 = pneg %p80
        %p181 = pneg %p109
        %p182 = pneg %p106
        %s183 = sand.u32 %s96, 1
        %s184 = scalar_lea.sflag [#allocation4], %s183
        %s185 = sand.u32 %s96, 1
        %s186 = smul.addr %s185, 4
        %s187 = scalar_lea.vmem [#allocation5], %s186
        %v188 = vld [vmem:[%s1] sm:$0x3]
        %v189 = vld [vmem:[%s2] sm:$0x3]
        %v190 = vld [vmem:[%s165] sm:$0xf]
        %192 = vset.pattern.permute.xlu0 0
        %193 = vperm.xlu0 %192, %v188
        %v194 = vpop.permute.xlu0 %193
        %v196 = vlaneseq
        %v197 = vshrl.u32 %v196, 7
        %v198 = vsub.s32 0, %v197
        %v199 = vrot.slane %v190, %v198
        %v200 = vmul.f32 %v194, %v199
        %201 = vset.pattern.permute.xlu0 1
        %202 = vperm.xlu0 %201, %v188
        %v203 = vpop.permute.xlu0 %202
        %v205 = vlaneseq
        %v206 = vshrl.u32 %v205, 7
        %v207 = vsub.s32 1, %v206
        %v208 = vrot.slane %v190, %v207
        %v209 = vmul.f32 %v203, %v208
        %v210 = vadd.f32 %v200, %v209
        %211 = vset.pattern.permute.xlu0 2
        %212 = vperm.xlu0 %211, %v188
        %v213 = vpop.permute.xlu0 %212
        %v215 = vlaneseq
        %v216 = vshrl.u32 %v215, 7
        %v217 = vsub.s32 2, %v216
        %v218 = vrot.slane %v190, %v217
        %v219 = vmul.f32 %v213, %v218
        %v220 = vadd.f32 %v210, %v219
        %221 = vset.pattern.permute.xlu0 3
        %222 = vperm.xlu0 %221, %v188
        %v223 = vpop.permute.xlu0 %222
        %v225 = vlaneseq
        %v226 = vshrl.u32 %v225, 7
        %v227 = vsub.s32 3, %v226
        %v228 = vrot.slane %v190, %v227
        %v229 = vmul.f32 %v223, %v228
        %v230 = vadd.f32 %v220, %v229
        %232 = vset.pattern.permute.xlu0 0
        %233 = vperm.xlu0 %232, %v189
        %v234 = vpop.permute.xlu0 %233
        %v236 = vadd.f32 %v230, %v234
        %237 = vst [vmem:[%s187] sm:$0x3] %v236
        %s238 = scalar_lea.vmem %s165, 4 [#allocation2]
        %v239 = vld [vmem:[%s238] sm:$0xf]
        %v240 = vlaneseq
        %v241 = vshrl.u32 %v240, 7
        %v242 = vsub.s32 0, %v241
        %v243 = vrot.slane %v239, %v242
        %v244 = vmul.f32 %v194, %v243
        %v245 = vlaneseq
        %v246 = vshrl.u32 %v245, 7
        %v247 = vsub.s32 1, %v246
        %v248 = vrot.slane %v239, %v247
        %v249 = vmul.f32 %v203, %v248
        %v250 = vadd.f32 %v244, %v249
        %v251 = vlaneseq
        %v252 = vshrl.u32 %v251, 7
        %v253 = vsub.s32 2, %v252
        %v254 = vrot.slane %v239, %v253
        %v255 = vmul.f32 %v213, %v254
        %v256 = vadd.f32 %v250, %v255
        %v257 = vlaneseq
        %v258 = vshrl.u32 %v257, 7
        %v259 = vsub.s32 3, %v258
        %v260 = vrot.slane %v239, %v259
        %v261 = vmul.f32 %v223, %v260
        %v262 = vadd.f32 %v256, %v261
        %v263 = vadd.f32 %v262, %v234
        %s264 = scalar_lea.vmem %s187, 2 [#allocation5]
        %265 = vst [vmem:[%s264] sm:$0x3] %v263
        %s266 = sand.u32 %s96, 1
        %s267 = scalar_lea.sflag [#allocation4], %s266
        %s268 = sand.u32 %s96, 1
        %s269 = smul.addr %s268, 4
        %s270 = scalar_lea.vmem [#allocation5], %s269
        // Predicated region
        $region37: #{tpu_custom_call.1} parent=31 // pred_check
          %p271 = pneg %p106
        $region38: #{tpu_custom_call.1} parent=31 // pred_check_branch
          %273 = sbr.rel (%p271) target = $region40
        $region39: #{tpu_custom_call.1} parent=31 // pred_region
          %s275 = ssub.s32 64, 64
          %276 = vsyncadd %s267, %s275
          %s277 = smul.addr %s20, 32
          %s278 = scalar_lea.hbm %s3, %s277
          %s279 = sshll.u32 %s270, 4
          %s280 = int_to_ptr.vmem [resolvable:$true] %s279
          %285 = dma.vmem_to_hbm [thread:$0]  %s280, 64, %s278, %s267, 32, 64, 2
        $region40: #{tpu_custom_call.1} parent=31 // pred_fallthru
          _
      $region32: #{tpu_custom_call.1} parent=5 // pred_fallthru
        _
      %p286 = scmp.le.s32.totalorder 2, %s15
      // Predicated region
      $region41: #{tpu_custom_call.1} parent=5 // pred_check
        %p287 = pneg %p286
      $region42: #{tpu_custom_call.1} parent=5 // pred_check_branch
        %289 = sbr.rel (%p287) target = $region44
      $region43: #{tpu_custom_call.1} parent=5 // pred_region
        %s290 = ssub.s32 %s15, 2
        // Predicated region
        $region45: #{tpu_custom_call.1} parent=43 // pred_check
          %p291 = pneg %p112
        $region46: #{tpu_custom_call.1} parent=43 // pred_check_branch
          %293 = sbr.rel (%p291) target = $region48
        $region47: #{tpu_custom_call.1} parent=43 // pred_region
          %s294 = sand.u32 %s97, 1
          %s295 = scalar_lea.sflag [#allocation4], %s294
          %s296 = sand.u32 %s97, 1
          %s297 = smul.addr %s296, 4
          %s298 = scalar_lea.vmem [#allocation5], %s297
          %299 = dma.done %s295, 64
        $region48: #{tpu_custom_call.1} parent=43 // pred_fallthru
          _
      $region44: #{tpu_custom_call.1} parent=5 // pred_fallthru
        _
    $region6: #{tpu_custom_call.1} parent=1 // loop_footer
      %s19 = sadd.s32 1, %s15
    $region7: #{tpu_custom_call.1} parent=1 // loop_footer_branch
      %14 = sbr.rel target = $region3
    $region8: #{tpu_custom_call.1} parent=1 // loop_exit
      _
    %300 = vsyncpa [#allocation3], 1
    %s301 = scalar_lea.sflag [#allocation3], 1
    %302 = vsyncpa %s301, 1
    %303 = vsyncpa [#allocation4], 1
    %s304 = scalar_lea.sflag [#allocation4], 1
    %305 = vsyncpa %s304, 1

</llo_original>
